<compile_context>
chip_gen: v5e
topology: v5e:2x2
jax: 0.10.0
libtpu: 0.0.40
codegen_flags: <defaults>
</compile_context>

<pallas_src>
import functools

import jax
import jax.numpy as jnp
from jax.experimental import pallas as pl
from jax.experimental.pallas import tpu as pltpu


def _value_net_kernel(x_ref,
                      w1_ref, b1_ref,
                      w2_ref, b2_ref,
                      w3_ref, b3_ref,
                      w4_ref, b4_ref,
                      o_ref):
    """One batch tile: 3 MXU matmuls + tanh, then a VPU/XLU value head."""
    bf16 = jnp.bfloat16
    f32 = jnp.float32

    x = x_ref[...].astype(bf16)                              # (tile, in)
    h1 = jnp.tanh(
        jnp.dot(x, w1_ref[...], preferred_element_type=f32)
        + b1_ref[...]).astype(bf16)                          # (tile, 64)  bf16
    h2 = jnp.tanh(
        jnp.dot(h1, w2_ref[...], preferred_element_type=f32)
        + b2_ref[...]).astype(bf16)                          # (tile, 128) bf16
    h3 = jnp.tanh(
        jnp.dot(h2, w3_ref[...], preferred_element_type=f32)
        + b3_ref[...])                                       # (tile, 64)  f32

    # Value head (64 -> 1): VPU multiply + XLU lane reduction (MXU stays free).
    value = jnp.sum(h3 * w4_ref[...], axis=-1)               # (tile,)
    # Lane-dense store: one (1, 1, tile) row per grid step (XLU slot is idle).
    o_ref[...] = (value[None, None, :] + b4_ref[...]).astype(o_ref.dtype)


def _full_spec(shape):
    """Full-array block with a constant block index (rank bound eagerly)."""
    rank = len(shape)
    return pl.BlockSpec(shape, lambda i, _r=rank: (0,) * _r)


def _cdiv(a, b):
    return (a + b - 1) // b


def _round_up(n, m):
    return _cdiv(n, m) * m


@functools.partial(jax.jit, static_argnames=("b_tile",))
def value_network_forward(x, params, b_tile=4096):
    """x: (B, input_dim) f32; params: w1..w4 as (in, out) f32, b1..b4 as
    (1, out) f32 (transposed vs PyTorch so the kernel does h = x @ W + b).

    Returns (B, 1) f32.
    """
    B, input_dim = x.shape

    # Batch tile: large (amortizes ~0.35us/step overhead, big x DMAs), capped
    # at ceil(B/2) rounded to 8 so the parallel grid has >=2 steps (v7x has 2
    # TensorCores that only split work along the parallel grid axis).
    tile = min(int(b_tile), _round_up(_cdiv(B, 2), 8))
    tile = max(tile, 8)

    # Pad only to a multiple of 8 rows (sublane alignment), never to a full
    # tile; Pallas masks the partial tail block.
    b_eff = _round_up(B, 8)
    if b_eff != B:
        x = jnp.pad(x, ((0, b_eff - B), (0, 0)))

    num_tiles = _cdiv(b_eff, tile)

    bf16 = jnp.bfloat16
    w1 = params["w1"].astype(bf16)                    # (in, 64)
    w2 = params["w2"].astype(bf16)                    # (64, 128)
    w3 = params["w3"].astype(bf16)                    # (128, 64)
    w4_row = params["w4"].reshape(1, -1)              # (1, 64) f32 (VPU head)
    b1, b2, b3, b4 = params["b1"], params["b2"], params["b3"], params["b4"]

    operands = (x, w1, b1, w2, b2, w3, b3, w4_row, b4)

    in_specs = [pl.BlockSpec((tile, input_dim), lambda i: (i, 0))]
    in_specs += [_full_spec(op.shape) for op in operands[1:]]
    out_spec = pl.BlockSpec((1, 1, tile), lambda i: (i, 0, 0))

    flops = 2 * num_tiles * tile * (input_dim * 64 + 64 * 128 + 128 * 64 + 64)
    transcendentals = num_tiles * tile * (64 + 128 + 64)
    bytes_accessed = (b_eff * input_dim * 4 + num_tiles * tile * 4
                      + (input_dim * 64 + 64 * 128 + 128 * 64) * 2
                      + (64 + 128 + 64 + 64 + 1) * 4)

    out = pl.pallas_call(
        _value_net_kernel,
        grid=(num_tiles,),
        in_specs=in_specs,
        out_specs=out_spec,
        out_shape=jax.ShapeDtypeStruct((num_tiles, 1, tile), jnp.float32),
        compiler_params=pltpu.CompilerParams(
            dimension_semantics=("parallel",),
            vmem_limit_bytes=32 * 1024 * 1024),
        cost_estimate=pl.CostEstimate(
            flops=flops,
            transcendentals=transcendentals,
            bytes_accessed=bytes_accessed),
    )(*operands)

    # (num_tiles, 1, tile) -> (num_tiles*tile, 1) is a contiguous reshape.
    return out.reshape(-1, 1)[:B]


def init_params(input_dim, key):
    """Deterministic init matching nn.Linear default U(-1/sqrt(fan_in), +)."""
    dims = [(input_dim, 64), (64, 128), (128, 64), (64, 1)]
    params = {}
    keys = jax.random.split(key, 2 * len(dims))
    for i, (fan_in, fan_out) in enumerate(dims):
        bound = 1.0 / float(jnp.sqrt(jnp.float32(fan_in)))
        w = jax.random.uniform(keys[2 * i], (fan_in, fan_out),
                               minval=-bound, maxval=bound, dtype=jnp.float32)
        b = jax.random.uniform(keys[2 * i + 1], (1, fan_out),
                               minval=-bound, maxval=bound, dtype=jnp.float32)
        params[f"w{i + 1}"] = w
        params[f"b{i + 1}"] = b
    return params


def reference_forward(x, params):
    """Pure-JAX reference matching the kernel's numerics (bf16 matmul
    operands, f32 accumulation, f32 bias/tanh/head)."""
    bf16 = jnp.bfloat16
    f32 = jnp.float32
    h = jnp.tanh(jnp.dot(x.astype(bf16), params["w1"].astype(bf16),
                         preferred_element_type=f32) + params["b1"]).astype(bf16)
    h = jnp.tanh(jnp.dot(h, params["w2"].astype(bf16),
                         preferred_element_type=f32) + params["b2"]).astype(bf16)
    h = jnp.tanh(jnp.dot(h, params["w3"].astype(bf16),
                         preferred_element_type=f32) + params["b3"])
    return jnp.sum(h * params["w4"].reshape(1, -1), axis=-1,
                   keepdims=True) + params["b4"]


if __name__ == "__main__":
    key = jax.random.PRNGKey(0)
    k_param, k_x1, k_x2 = jax.random.split(key, 3)

    input_dim = 32
    params = init_params(input_dim, k_param)

    # Small aligned batch (single tile).
    x1 = jax.random.normal(k_x1, (8, input_dim), dtype=jnp.float32)
    out1 = jax.block_until_ready(value_network_forward(x1, params))
    ref1 = reference_forward(x1, params)
    assert out1.shape == (8, 1)
    assert jnp.allclose(out1, ref1, atol=5e-3, rtol=5e-3), "mismatch (aligned)"

    # Unaligned batch: multi-step grid + masked partial tail block.
    x2 = jax.random.normal(k_x2, (200, input_dim), dtype=jnp.float32)
    out2 = jax.block_until_ready(value_network_forward(x2, params))
    ref2 = reference_forward(x2, params)
    assert out2.shape == (200, 1)
    assert jnp.allclose(out2, ref2, atol=5e-3, rtol=5e-3), "mismatch (ragged)"

    print("KERNEL_OK")
</pallas_src>

<mosaic_0001>
module attributes {stable_mosaic.version = 11 : i64} {
  func.func @_value_net_kernel(%arg0: i32, %arg1: memref<8x32xf32, #tpu.memory_space<vmem>>, %arg2: memref<32x64xbf16, #tpu.memory_space<vmem>>, %arg3: memref<1x64xf32, #tpu.memory_space<vmem>>, %arg4: memref<64x128xbf16, #tpu.memory_space<vmem>>, %arg5: memref<1x128xf32, #tpu.memory_space<vmem>>, %arg6: memref<128x64xbf16, #tpu.memory_space<vmem>>, %arg7: memref<1x64xf32, #tpu.memory_space<vmem>>, %arg8: memref<1x64xf32, #tpu.memory_space<vmem>>, %arg9: memref<1x1xf32, #tpu.memory_space<vmem>>, %arg10: memref<1x1x8xf32, #tpu.memory_space<vmem>>) attributes {dimension_semantics = [#tpu.dimension_semantics<parallel>], iteration_bounds = array<i64: 1>, scalar_prefetch = 0 : i64, scratch_operands = 0 : i64, tpu.core_type = #tpu.core_type<tc>, window_params = [{transform_indices = @transform_0, window_bounds = array<i64: 8, 32>}, {pipeline_mode = #tpu.pipeline_mode<synchronous>, transform_indices = @transform_1, window_bounds = array<i64: 32, 64>}, {pipeline_mode = #tpu.pipeline_mode<synchronous>, transform_indices = @transform_2, window_bounds = array<i64: 1, 64>}, {pipeline_mode = #tpu.pipeline_mode<synchronous>, transform_indices = @transform_3, window_bounds = array<i64: 64, 128>}, {pipeline_mode = #tpu.pipeline_mode<synchronous>, transform_indices = @transform_4, window_bounds = array<i64: 1, 128>}, {pipeline_mode = #tpu.pipeline_mode<synchronous>, transform_indices = @transform_5, window_bounds = array<i64: 128, 64>}, {pipeline_mode = #tpu.pipeline_mode<synchronous>, transform_indices = @transform_6, window_bounds = array<i64: 1, 64>}, {pipeline_mode = #tpu.pipeline_mode<synchronous>, transform_indices = @transform_7, window_bounds = array<i64: 1, 64>}, {pipeline_mode = #tpu.pipeline_mode<synchronous>, transform_indices = @transform_8, window_bounds = array<i64: 1, 1>}, {transform_indices = @transform_9, window_bounds = array<i64: 1, 1, 8>}]} {
    %c0 = arith.constant 0 : index
    %c0_0 = arith.constant 0 : index
    %0 = vector.load %arg1[%c0, %c0_0] : memref<8x32xf32, #tpu.memory_space<vmem>>, vector<8x32xf32>
    %1 = arith.truncf %0 : vector<8x32xf32> to vector<8x32xbf16>
    %c0_1 = arith.constant 0 : index
    %c0_2 = arith.constant 0 : index
    %2 = vector.load %arg2[%c0_1, %c0_2] : memref<32x64xbf16, #tpu.memory_space<vmem>>, vector<32x64xbf16>
    %cst = arith.constant dense<0.000000e+00> : vector<8x64xf32>
    %3 = tpu.matmul %1, %2, %cst {dimension_numbers = #tpu.dot_dimension_numbers<[1], [0], [0], [1], [0, 0, 1, 1], [], []>} : vector<8x32xbf16>, vector<32x64xbf16>, vector<8x64xf32> -> vector<8x64xf32>
    %c0_3 = arith.constant 0 : index
    %c0_4 = arith.constant 0 : index
    %4 = vector.load %arg3[%c0_3, %c0_4] : memref<1x64xf32, #tpu.memory_space<vmem>>, vector<1x64xf32>
    %5 = vector.broadcast %4 : vector<1x64xf32> to vector<8x64xf32>
    %6 = arith.addf %3, %5 : vector<8x64xf32>
    %7 = math.tanh %6 : vector<8x64xf32>
    %8 = arith.truncf %7 : vector<8x64xf32> to vector<8x64xbf16>
    %c0_5 = arith.constant 0 : index
    %c0_6 = arith.constant 0 : index
    %9 = vector.load %arg4[%c0_5, %c0_6] : memref<64x128xbf16, #tpu.memory_space<vmem>>, vector<64x128xbf16>
    %cst_7 = arith.constant dense<0.000000e+00> : vector<8x128xf32>
    %10 = tpu.matmul %8, %9, %cst_7 {dimension_numbers = #tpu.dot_dimension_numbers<[1], [0], [0], [1], [0, 0, 1, 1], [], []>} : vector<8x64xbf16>, vector<64x128xbf16>, vector<8x128xf32> -> vector<8x128xf32>
    %c0_8 = arith.constant 0 : index
    %c0_9 = arith.constant 0 : index
    %11 = vector.load %arg5[%c0_8, %c0_9] : memref<1x128xf32, #tpu.memory_space<vmem>>, vector<1x128xf32>
    %12 = vector.broadcast %11 : vector<1x128xf32> to vector<8x128xf32>
    %13 = arith.addf %10, %12 : vector<8x128xf32>
    %14 = math.tanh %13 : vector<8x128xf32>
    %15 = arith.truncf %14 : vector<8x128xf32> to vector<8x128xbf16>
    %c0_10 = arith.constant 0 : index
    %c0_11 = arith.constant 0 : index
    %16 = vector.load %arg6[%c0_10, %c0_11] : memref<128x64xbf16, #tpu.memory_space<vmem>>, vector<128x64xbf16>
    %cst_12 = arith.constant dense<0.000000e+00> : vector<8x64xf32>
    %17 = tpu.matmul %15, %16, %cst_12 {dimension_numbers = #tpu.dot_dimension_numbers<[1], [0], [0], [1], [0, 0, 1, 1], [], []>} : vector<8x128xbf16>, vector<128x64xbf16>, vector<8x64xf32> -> vector<8x64xf32>
    %c0_13 = arith.constant 0 : index
    %c0_14 = arith.constant 0 : index
    %18 = vector.load %arg7[%c0_13, %c0_14] : memref<1x64xf32, #tpu.memory_space<vmem>>, vector<1x64xf32>
    %19 = vector.broadcast %18 : vector<1x64xf32> to vector<8x64xf32>
    %20 = arith.addf %17, %19 : vector<8x64xf32>
    %21 = math.tanh %20 : vector<8x64xf32>
    %c0_15 = arith.constant 0 : index
    %c0_16 = arith.constant 0 : index
    %22 = vector.load %arg8[%c0_15, %c0_16] : memref<1x64xf32, #tpu.memory_space<vmem>>, vector<1x64xf32>
    %23 = vector.broadcast %22 : vector<1x64xf32> to vector<8x64xf32>
    %24 = arith.mulf %21, %23 : vector<8x64xf32>
    %cst_17 = arith.constant dense<0.000000e+00> : vector<8xf32>
    %25 = vector.multi_reduction <add>, %24, %cst_17 [1] : vector<8x64xf32> to vector<8xf32>
    %26 = vector.shape_cast %25 : vector<8xf32> to vector<1x1x8xf32>
    %c0_18 = arith.constant 0 : index
    %c0_19 = arith.constant 0 : index
    %27 = vector.load %arg9[%c0_18, %c0_19] : memref<1x1xf32, #tpu.memory_space<vmem>>, vector<1x1xf32>
    %28 = vector.shape_cast %27 : vector<1x1xf32> to vector<1x1x1xf32>
    %29 = vector.broadcast %28 : vector<1x1x1xf32> to vector<1x1x8xf32>
    %30 = arith.addf %26, %29 : vector<1x1x8xf32>
    %c0_20 = arith.constant 0 : index
    %c0_21 = arith.constant 0 : index
    %c0_22 = arith.constant 0 : index
    %31 = vector.load %arg10[%c0_20, %c0_21, %c0_22] : memref<1x1x8xf32, #tpu.memory_space<vmem>>, vector<1x1x8xf32>
    tpu.vector_store %arg10[%c0_20, %c0_21, %c0_22], %30 {strides = array<i32>} : memref<1x1x8xf32, #tpu.memory_space<vmem>>, vector<1x1x8xf32>,
    return
  }
  func.func @transform_0(%arg0: i32) -> (i32, i32) {
    %c0_i32 = arith.constant 0 : i32
    %c0_i32_0 = arith.constant 0 : i32
    return %arg0, %c0_i32 : i32, i32
  }
  func.func @transform_1(%arg0: i32) -> (i32, i32) {
    %c0_i32 = arith.constant 0 : i32
    %c0_i32_0 = arith.constant 0 : i32
    %c0_i32_1 = arith.constant 0 : i32
    return %c0_i32, %c0_i32_0 : i32, i32
  }
  func.func @transform_2(%arg0: i32) -> (i32, i32) {
    %c0_i32 = arith.constant 0 : i32
    %c0_i32_0 = arith.constant 0 : i32
    %c0_i32_1 = arith.constant 0 : i32
    return %c0_i32, %c0_i32_0 : i32, i32
  }
  func.func @transform_3(%arg0: i32) -> (i32, i32) {
    %c0_i32 = arith.constant 0 : i32
    %c0_i32_0 = arith.constant 0 : i32
    %c0_i32_1 = arith.constant 0 : i32
    return %c0_i32, %c0_i32_0 : i32, i32
  }
  func.func @transform_4(%arg0: i32) -> (i32, i32) {
    %c0_i32 = arith.constant 0 : i32
    %c0_i32_0 = arith.constant 0 : i32
    %c0_i32_1 = arith.constant 0 : i32
    return %c0_i32, %c0_i32_0 : i32, i32
  }
  func.func @transform_5(%arg0: i32) -> (i32, i32) {
    %c0_i32 = arith.constant 0 : i32
    %c0_i32_0 = arith.constant 0 : i32
    %c0_i32_1 = arith.constant 0 : i32
    return %c0_i32, %c0_i32_0 : i32, i32
  }
  func.func @transform_6(%arg0: i32) -> (i32, i32) {
    %c0_i32 = arith.constant 0 : i32
    %c0_i32_0 = arith.constant 0 : i32
    %c0_i32_1 = arith.constant 0 : i32
    return %c0_i32, %c0_i32_0 : i32, i32
  }
  func.func @transform_7(%arg0: i32) -> (i32, i32) {
    %c0_i32 = arith.constant 0 : i32
    %c0_i32_0 = arith.constant 0 : i32
    %c0_i32_1 = arith.constant 0 : i32
    return %c0_i32, %c0_i32_0 : i32, i32
  }
  func.func @transform_8(%arg0: i32) -> (i32, i32) {
    %c0_i32 = arith.constant 0 : i32
    %c0_i32_0 = arith.constant 0 : i32
    %c0_i32_1 = arith.constant 0 : i32
    return %c0_i32, %c0_i32_0 : i32, i32
  }
  func.func @transform_9(%arg0: i32) -> (i32, i32, i32) {
    %c0_i32 = arith.constant 0 : i32
    %c0_i32_0 = arith.constant 0 : i32
    %c0_i32_1 = arith.constant 0 : i32
    return %arg0, %c0_i32, %c0_i32_0 : i32, i32, i32
  }
}

</mosaic_0001>

<llo_original>
// kernel: value_network_forward.1
$region0: #{value_network_forward.1}
  #allocation0 [shape = 'u32[]', space=smem, size = 0x4, offset = 0x4, fixed_abs, tag = 'smem constant byte address 0x4 - core index']
  #allocation1 [shape = 'u32[72,128]{1,0:T(1,128)}', space=vmem, size = 0x9000, scoped, tag = 'internal scratch']
  #allocation2 [shape = 'f32[1,1]{1,0:T(1,128)S(1)}', space=vmem, size = 0x200, scoped, tag = 'scoped memory for value_network_forward.1']
  %s0 = inlined_call_operand.vmem [shape: f32[8,32], index: 0, kind: input, shape index: {}]
  %s1 = inlined_call_operand.vmem [shape: bf16[32,64], index: 1, kind: input, shape index: {}]
  %s2 = inlined_call_operand.vmem [shape: f32[1,64], index: 2, kind: input, shape index: {}]
  %s3 = inlined_call_operand.vmem [shape: bf16[64,128], index: 3, kind: input, shape index: {}]
  %s4 = inlined_call_operand.vmem [shape: f32[1,128], index: 4, kind: input, shape index: {}]
  %s5 = inlined_call_operand.vmem [shape: bf16[128,64], index: 5, kind: input, shape index: {}]
  %s6 = inlined_call_operand.vmem [shape: f32[1,64], index: 6, kind: input, shape index: {}]
  %s7 = inlined_call_operand.vmem [shape: f32[1,64], index: 7, kind: input, shape index: {}]
  %s8 = inlined_call_operand.<no memory space> [shape: f32[1,1], index: 8, kind: input, shape index: {}]
  %s9 = inlined_call_operand.hbm [shape: f32[1,1,8], index: 9, kind: output, shape index: {}]
  %s10 = sld [smem:[#allocation0]]
  $region46: #{value_network_forward.1} parent=0
    _
  %s12 = ssub.s32 1, %s10
  %s13 = scalar_select 0, %s12, %s10
  %v14 = vstv %s8
  %15 = vst [vmem:[#allocation2] sm:$0x1] %v14
  $region1: #{value_network_forward.1} parent=0
    #allocation3 [shape = 'u8[512]{0}', space=vmem, size = 0x400, scoped, tag = 'output window, operand 0, single buffered']
    #allocation4 [shape = 's32[1]{0}', space=sflag, size = 0x4, scoped, tag = 'scoped memory for value_network_forward.1']
    %16 = vsyncpa [#allocation4], 0
    // Predicated region
    $region2: #{value_network_forward.1} parent=1 // pred_check
      _
    $region3: #{value_network_forward.1} parent=1 // pred_check_branch
      %18 = sbr.rel (0) target = $region5
    $region4: #{value_network_forward.1} parent=1 // pred_region
      _
    $region5: #{value_network_forward.1} parent=1 // pred_fallthru
      _
    // Predicated region
    $region6: #{value_network_forward.1} parent=1 // pred_check
      _
    $region7: #{value_network_forward.1} parent=1 // pred_check_branch
      %20 = sbr.rel (0) target = $region9
    $region8: #{value_network_forward.1} parent=1 // pred_region
      _
    $region9: #{value_network_forward.1} parent=1 // pred_fallthru
      _
    // Predicated region
    $region10: #{value_network_forward.1} parent=1 // pred_check
      _
    $region11: #{value_network_forward.1} parent=1 // pred_check_branch
      %22 = sbr.rel (0) target = $region13
    $region12: #{value_network_forward.1} parent=1 // pred_region
      _
    $region13: #{value_network_forward.1} parent=1 // pred_fallthru
      _
    // Predicated region
    $region14: #{value_network_forward.1} parent=1 // pred_check
      _
    $region15: #{value_network_forward.1} parent=1 // pred_check_branch
      %24 = sbr.rel (0) target = $region17
    $region16: #{value_network_forward.1} parent=1 // pred_region
      _
    $region17: #{value_network_forward.1} parent=1 // pred_fallthru
      _
    // Predicated region
    $region18: #{value_network_forward.1} parent=1 // pred_check
      _
    $region19: #{value_network_forward.1} parent=1 // pred_check_branch
      %26 = sbr.rel (0) target = $region21
    $region20: #{value_network_forward.1} parent=1 // pred_region
      _
    $region21: #{value_network_forward.1} parent=1 // pred_fallthru
      _
    // Predicated region
    $region22: #{value_network_forward.1} parent=1 // pred_check
      _
    $region23: #{value_network_forward.1} parent=1 // pred_check_branch
      %28 = sbr.rel (0) target = $region25
    $region24: #{value_network_forward.1} parent=1 // pred_region
      _
    $region25: #{value_network_forward.1} parent=1 // pred_fallthru
      _
    // Predicated region
    $region26: #{value_network_forward.1} parent=1 // pred_check
      _
    $region27: #{value_network_forward.1} parent=1 // pred_check_branch
      %30 = sbr.rel (0) target = $region29
    $region28: #{value_network_forward.1} parent=1 // pred_region
      _
    $region29: #{value_network_forward.1} parent=1 // pred_fallthru
      _
    // Predicated region
    $region30: #{value_network_forward.1} parent=1 // pred_check
      _
    $region31: #{value_network_forward.1} parent=1 // pred_check_branch
      %32 = sbr.rel (0) target = $region33
    $region32: #{value_network_forward.1} parent=1 // pred_region
      _
    $region33: #{value_network_forward.1} parent=1 // pred_fallthru
      _
    // Predicated region
    $region34: #{value_network_forward.1} parent=1 // pred_check
      _
    $region35: #{value_network_forward.1} parent=1 // pred_check_branch
      %34 = sbr.rel (0) target = $region37
    $region36: #{value_network_forward.1} parent=1 // pred_region
      _
    $region37: #{value_network_forward.1} parent=1 // pred_fallthru
      _
    %v36 = vld [vmem:[%s0] sm:$0xff]
    %v37 = vpack.c.bf16 %v36, %v36
    %v38 = vld [vmem:[%s1] sm:$0xf]
    %v39 = vld [vmem:[%s1 + $0x4] sm:$0xf]
    %v40 = vld [vmem:[%s1 + $0x8] sm:$0xf]
    %v41 = vld [vmem:[%s1 + $0xc] sm:$0xf]
    %v42 = vld [vmem:[%s2] sm:$0x1]
    %v44 = vperm.slane %v42, 0
    %v50 = vunpack.c.l.b16 %v38
    %v51 = vunpack.c.l.b16 %v39
    %v52 = vunpack.c.l.b16 %v40
    %v53 = vunpack.c.l.b16 %v41
    %v54 = vpack.c.b16 %v51, %v50
    %v55 = vpack.c.b16 %v53, %v52
    %vm58 = vcmask 261120
    %v60 = vsel %vm58, %v37, 0
    %62 = vmatpush.bf16.msra.mxu0 0
    %63 = vmatpush.bf16.msra.mxu0 0
    %64 = vmatpush.bf16.msra.mxu0 0
    %65 = vmatpush.bf16.msra.mxu0 0
    %66 = vmatpush.bf16.msra.mxu0 0
    %67 = vmatpush.bf16.msra.mxu0 0
    %68 = vmatpush.bf16.msra.mxu0 %v55
    %69 = vmatpush.bf16.msra.mxu0 %v54
    %70 = vmatmul.bf16.gmra.mxu0 %v60
    %v71 = vpop.f32.mrf.mxu0
    %v72 = vadd.f32 %v44, %v71
    %v73 = vpop.f32.mrf.mxu0
    %74 = vdwg.mxu0
    %v75 = vtanh.pop %v72
    %v76 = vpack.c.bf16 %v75, %v75
    %v77 = vld [vmem:[%s3] sm:$0xf]
    %v78 = vld [vmem:[%s3 + $0x4] sm:$0xf]
    %v79 = vld [vmem:[%s3 + $0x8] sm:$0xf]
    %v80 = vld [vmem:[%s3 + $0xc] sm:$0xf]
    %v81 = vld [vmem:[%s3 + $0x10] sm:$0xf]
    %v82 = vld [vmem:[%s3 + $0x14] sm:$0xf]
    %v83 = vld [vmem:[%s3 + $0x18] sm:$0xf]
    %v84 = vld [vmem:[%s3 + $0x1c] sm:$0xf]
    %v85 = vld [vmem:[%s4] sm:$0x1]
    %v87 = vperm.slane %v85, 0
    %v97 = vunpack.c.l.b16 %v77
    %v98 = vunpack.c.l.b16 %v78
    %v99 = vunpack.c.l.b16 %v79
    %v100 = vunpack.c.l.b16 %v80
    %v101 = vunpack.c.l.b16 %v81
    %v102 = vunpack.c.l.b16 %v82
    %v103 = vunpack.c.l.b16 %v83
    %v104 = vunpack.c.l.b16 %v84
    %v105 = vpack.c.b16 %v98, %v97
    %v106 = vpack.c.b16 %v100, %v99
    %v107 = vpack.c.b16 %v102, %v101
    %v108 = vpack.c.b16 %v104, %v103
    %vm113 = vcmask 523264
    %v115 = vsel %vm113, %v76, 0
    %117 = vmatpush.bf16.msra.mxu0 0
    %118 = vmatpush.bf16.msra.mxu0 0
    %119 = vmatpush.bf16.msra.mxu0 0
    %120 = vmatpush.bf16.msra.mxu0 0
    %121 = vmatpush.bf16.msra.mxu0 %v108
    %122 = vmatpush.bf16.msra.mxu0 %v107
    %123 = vmatpush.bf16.msra.mxu0 %v106
    %124 = vmatpush.bf16.msra.mxu0 %v105
    %125 = vmatmul.bf16.gmra.mxu0 %v115
    %v126 = vpop.f32.mrf.mxu0
    %v127 = vadd.f32 %v87, %v126
    %v128 = vpop.f32.mrf.mxu0
    %129 = vdwg.mxu0
    %v130 = vtanh.pop %v127
    %v131 = vpack.c.bf16 %v130, %v130
    %v132 = vld [vmem:[%s5] sm:$0xf]
    %v133 = vld [vmem:[%s5 + $0x4] sm:$0xf]
    %v134 = vld [vmem:[%s5 + $0x8] sm:$0xf]
    %v135 = vld [vmem:[%s5 + $0xc] sm:$0xf]
    %v136 = vld [vmem:[%s5 + $0x10] sm:$0xf]
    %v137 = vld [vmem:[%s5 + $0x14] sm:$0xf]
    %v138 = vld [vmem:[%s5 + $0x18] sm:$0xf]
    %v139 = vld [vmem:[%s5 + $0x1c] sm:$0xf]
    %v140 = vld [vmem:[%s5 + $0x20] sm:$0xf]
    %v141 = vld [vmem:[%s5 + $0x24] sm:$0xf]
    %v142 = vld [vmem:[%s5 + $0x28] sm:$0xf]
    %v143 = vld [vmem:[%s5 + $0x2c] sm:$0xf]
    %v144 = vld [vmem:[%s5 + $0x30] sm:$0xf]
    %v145 = vld [vmem:[%s5 + $0x34] sm:$0xf]
    %v146 = vld [vmem:[%s5 + $0x38] sm:$0xf]
    %v147 = vld [vmem:[%s5 + $0x3c] sm:$0xf]
    %v148 = vld [vmem:[%s6] sm:$0x1]
    %v150 = vperm.slane %v148, 0
    %v168 = vunpack.c.l.b16 %v132
    %v169 = vunpack.c.l.b16 %v133
    %v170 = vunpack.c.l.b16 %v134
    %v171 = vunpack.c.l.b16 %v135
    %v172 = vunpack.c.l.b16 %v136
    %v173 = vunpack.c.l.b16 %v137
    %v174 = vunpack.c.l.b16 %v138
    %v175 = vunpack.c.l.b16 %v139
    %v176 = vunpack.c.l.b16 %v140
    %v177 = vunpack.c.l.b16 %v141
    %v178 = vunpack.c.l.b16 %v142
    %v179 = vunpack.c.l.b16 %v143
    %v180 = vunpack.c.l.b16 %v144
    %v181 = vunpack.c.l.b16 %v145
    %v182 = vunpack.c.l.b16 %v146
    %v183 = vunpack.c.l.b16 %v147
    %v184 = vpack.c.b16 %v169, %v168
    %v185 = vpack.c.b16 %v171, %v170
    %v186 = vpack.c.b16 %v173, %v172
    %v187 = vpack.c.b16 %v175, %v174
    %v188 = vpack.c.b16 %v177, %v176
    %v189 = vpack.c.b16 %v179, %v178
    %v190 = vpack.c.b16 %v181, %v180
    %v191 = vpack.c.b16 %v183, %v182
    %200 = vmatpush.bf16.msra.mxu0 %v191
    %201 = vmatpush.bf16.msra.mxu0 %v190
    %202 = vmatpush.bf16.msra.mxu0 %v189
    %203 = vmatpush.bf16.msra.mxu0 %v188
    %204 = vmatpush.bf16.msra.mxu0 %v187
    %205 = vmatpush.bf16.msra.mxu0 %v186
    %206 = vmatpush.bf16.msra.mxu0 %v185
    %207 = vmatpush.bf16.msra.mxu0 %v184
    %208 = vmatmul.bf16.gmra.mxu0 %v131
    %v209 = vpop.f32.mrf.mxu0
    %v210 = vadd.f32 %v150, %v209
    %v211 = vpop.f32.mrf.mxu0
    %212 = vdwg.mxu0
    %v213 = vtanh.pop %v210
    %v214 = vld [vmem:[%s7] sm:$0x1]
    %v216 = vperm.slane %v214, 0
    %v218 = vmul.f32 %v213, %v216
    %v219 = vsel %vm113, %v218, 0.0
    %220 = vadd.xlane.f32.xlu0 %v219
    %v221 = vpop.xlane.xlu0 %220
    %v222 = vld [vmem:[#allocation2] sm:$0x1]
    %224 = vset.pattern.permute.xlu0 0
    %225 = vperm.xlu0 %224, %v222
    %v226 = vpop.permute.xlu0 %225
    %v228 = vperm.slane %v226, 0
    %v229 = vadd.f32 %v221, %v228
    %v231 = vlaneseq
    %v232 = vand.u32 %v231, 127
    %v233 = vperm.slane %v229, %v232
    %vm235 = vcmask 57344
    %236 = vst.msk [vmem:[#allocation3] sm:$0x1] %vm235, %v233
    // Predicated region
    $region38: #{value_network_forward.1} parent=1 // pred_check
      _
    $region39: #{value_network_forward.1} parent=1 // pred_check_branch
      %238 = sbr.rel (0) target = $region41
    $region40: #{value_network_forward.1} parent=1 // pred_region
      %240 = vsyncadd [#allocation4], 0
      %s242 = sshll.u32 [#allocation3], 4
      %s243 = int_to_ptr.vmem [resolvable:$true] %s242
      %s244 = sshll.u32 %s9, 4
      %s245 = int_to_ptr.hbm [resolvable:$true] %s244
      %247 = dma.vmem_to_hbm [thread:$0]  %s243, 16, %s245, [#allocation4]
    $region41: #{value_network_forward.1} parent=1 // pred_fallthru
      _
    // Predicated region
    $region42: #{value_network_forward.1} parent=1 // pred_check
      _
    $region43: #{value_network_forward.1} parent=1 // pred_check_branch
      %249 = sbr.rel (0) target = $region45
    $region44: #{value_network_forward.1} parent=1 // pred_region
      %251 = dma.done [#allocation4], 16
    $region45: #{value_network_forward.1} parent=1 // pred_fallthru
      _
    %252 = vsyncpa [#allocation4], 1

</llo_original>
